<compile_context>
chip_gen: v7x
topology: tpu7x:2x2x1
jax: 0.10.0
libtpu: 0.0.40
codegen_flags: <defaults>
</compile_context>

<pallas_src>
import functools

import jax
import jax.numpy as jnp
import numpy as np
from jax.experimental import pallas as pl
from jax.experimental.pallas import tpu as pltpu


def _fbeta_kernel(preds_ref, trues_ref, fb_ref, p_acc, s_acc, *,
                  num_ch, n_trues_ch, n_oh, n_broadcast, beta2, smooth):
    n = pl.program_id(1)                      # batch (reduction) axis, innermost

    @pl.when(n == 0)
    def _():
        p_acc[...] = jnp.zeros_like(p_acc)
        s_acc[...] = jnp.zeros_like(s_acc)

    # argmax over the channel axis with first-occurrence tie-break
    # (torch.argmax semantics), on dense (TN, TS, L) sublane/lane tiles.
    # Cast to f32 right after load (v5e has no bf16 VPU path).
    best = preds_ref[:, 0, :, :].astype(jnp.float32)
    best_idx = jnp.zeros(best.shape, dtype=jnp.int32)
    for c in range(1, num_ch):
        cur = preds_ref[:, c, :, :].astype(jnp.float32)
        better = cur > best
        best = jnp.where(better, cur, best)
        best_idx = jnp.where(better, c, best_idx)

    # one-hot planes for classes 1..n_oh (torch.stack([(preds==i) ...], dim=1)),
    # kept as a static Python list of dense (TN, TS, L) tiles (no 4D stack).
    oh = [(best_idx == (1 + j)).astype(jnp.float32) for j in range(n_oh)]

    # accumulate p/s over the batch block, per broadcast output channel
    # (trues[:, 1:] broadcast against the one-hot stack, like torch).
    for cb in range(n_broadcast):
        ct = cb if n_trues_ch > 1 else 0      # trues channel (after bg drop)
        co = cb if n_oh > 1 else 0            # one-hot channel
        t_c = trues_ref[:, 1 + ct, :, :].astype(jnp.float32)   # drop bg in-kernel
        p_acc[cb] += jnp.sum(t_c * oh[co], axis=0)             # (TS, L)
        s_acc[cb] += jnp.sum(beta2 * t_c + oh[co], axis=0)

    @pl.when(n == pl.num_programs(1) - 1)
    def _():
        fb_ref[...] = ((beta2 + 1.0) * p_acc[...] + smooth) / (s_acc[...] + smooth)


def _choose_tiles(N, C, Cb, S, L, p_bytes, t_bytes, budget=16 * 1024 * 1024):
    """Pick (TN, TS): batch block and HW tile (sublane units of the (S, L) view)."""

    def cost(tn, ts):
        inputs = tn * C * ts * L * (p_bytes + t_bytes)   # one pipeline buffer of each input
        work = tn * ts * L * 4 * (2 * C + 3 * Cb)        # rough f32 in-kernel working set
        scratch = 2 * Cb * ts * L * 4                    # p/s accumulators
        out = Cb * ts * L * 4                            # fb output block
        return 2 * inputs + work + scratch + 2 * out     # x2 for double-buffering

    # HW tile: must divide S and be a multiple of 8 (or be all of S).
    ts_cands = sorted({S} | {d for d in range(8, S, 8) if S % d == 0}, reverse=True)
    ts = next((c for c in ts_cands if cost(1, c) <= budget), min(ts_cands))

    # Batch block: largest divisor of N that still fits the VMEM budget.
    tn_cands = sorted((d for d in range(1, N + 1) if N % d == 0), reverse=True)
    tn = next((c for c in tn_cands if cost(c, ts) <= budget), 1)
    return tn, ts


def fbeta_score(preds, trues, *, beta=1, smooth=1e-7):
    """FbetaScore.forward with the default config (non-binary, axes=(0,), classes=None)."""
    N, C, H, W = preds.shape
    assert trues.shape == (N, C, H, W)
    HW = H * W
    beta2 = float(beta) ** 2

    Ct = C - 1                    # channels of trues after dropping background
    n_oh = C - 2                  # range(1, trues.shape[1]) after slicing
    assert n_oh >= 1, "forward (non-binary path) needs at least 3 input channels"
    Cb = int(np.broadcast_shapes((Ct,), (n_oh,))[0])   # torch broadcast of (Ct) x (n_oh)

    # lane-dense pixel layout: contiguous (free) reshape NCHW -> (N, C, S, L)
    if HW % 128 == 0:
        L, S = 128, HW // 128
    else:
        L, S = HW, 1
    preds_r = preds.reshape(N, C, S, L)
    trues_r = trues.reshape(N, C, S, L)

    tn, ts = _choose_tiles(N, C, Cb, S, L,
                           preds.dtype.itemsize, trues.dtype.itemsize)
    n_hw = S // ts
    n_nb = N // tn

    kernel = functools.partial(_fbeta_kernel, num_ch=C, n_trues_ch=Ct, n_oh=n_oh,
                               n_broadcast=Cb, beta2=beta2, smooth=float(smooth))

    fb_map = pl.pallas_call(
        kernel,
        out_shape=jax.ShapeDtypeStruct((Cb, S, L), jnp.float32),
        grid_spec=pltpu.PrefetchScalarGridSpec(
            num_scalar_prefetch=0,
            grid=(n_hw, n_nb),                    # HW tiles (parallel), batch blocks (reduction)
            in_specs=[
                pl.BlockSpec((tn, C, ts, L), lambda h, n: (n, 0, h, 0)),
                pl.BlockSpec((tn, C, ts, L), lambda h, n: (n, 0, h, 0)),
            ],
            out_specs=pl.BlockSpec((Cb, ts, L), lambda h, n: (0, h, 0)),
            scratch_shapes=[
                pltpu.VMEM((Cb, ts, L), jnp.float32),   # p accumulator
                pltpu.VMEM((Cb, ts, L), jnp.float32),   # s accumulator
            ],
        ),
        compiler_params=pltpu.CompilerParams(
            dimension_semantics=("parallel", "arbitrary"),
            vmem_limit_bytes=32 * 1024 * 1024),
    )(preds_r, trues_r)

    # fb_map has exactly Cb*H*W elements -> mean == fb.mean()
    fb_mean = jnp.mean(fb_map)
    return {f"F{beta}": fb_mean}


def _ref_fbeta(preds, trues, beta=1, smooth=1e-7):
    """NumPy float64 reference mirroring the PyTorch forward (default config)."""
    preds = np.asarray(preds, np.float64)
    trues = np.asarray(trues, np.float64)
    beta2 = beta ** 2
    trues_s = trues[:, 1:, ...]
    am = np.argmax(preds, axis=1)
    oh = np.stack([(am == i).astype(np.float64)
                   for i in range(1, trues_s.shape[1])], axis=1)
    p = (beta2 + 1) * (trues_s * oh).sum(axis=0)
    s = (beta2 * trues_s + oh).sum(axis=0)
    fb = (p + smooth) / (s + smooth)
    return fb.mean()


if __name__ == "__main__":
    key = jax.random.PRNGKey(0)
    k1, k2 = jax.random.split(key)

    N, C, H, W = 2, 3, 16, 16
    preds = jax.random.normal(k1, (N, C, H, W), dtype=jnp.float32)
    labels = jax.random.randint(k2, (N, H, W), 0, C)
    trues = jax.nn.one_hot(labels, C, axis=1, dtype=jnp.float32)  # NCHW one-hot

    result = fbeta_score(preds, trues)
    val = jax.block_until_ready(result["F1"])

    ref = _ref_fbeta(preds, trues)
    assert abs(float(val) - float(ref)) < 1e-5, (float(val), float(ref))

    print("KERNEL_OK")
</pallas_src>

<mosaic_0001>
module attributes {stable_mosaic.version = 11 : i64} {
  func.func @_fbeta_kernel(%arg0: i32, %arg1: i32, %arg2: memref<2x3x2x128xf32, #tpu.memory_space<vmem>>, %arg3: memref<2x3x2x128xf32, #tpu.memory_space<vmem>>, %arg4: memref<2x2x128xf32, #tpu.memory_space<vmem>>, %arg5: memref<2x2x128xf32, #tpu.memory_space<vmem>>, %arg6: memref<2x2x128xf32, #tpu.memory_space<vmem>>) attributes {dimension_semantics = [#tpu.dimension_semantics<parallel>, #tpu.dimension_semantics<arbitrary>], iteration_bounds = array<i64: 1, 1>, scalar_prefetch = 0 : i64, scratch_operands = 2 : i64, tpu.core_type = #tpu.core_type<tc>, window_params = [{transform_indices = @transform_0, window_bounds = array<i64: 2, 3, 2, 128>}, {transform_indices = @transform_1, window_bounds = array<i64: 2, 3, 2, 128>}, {transform_indices = @transform_2, window_bounds = array<i64: 2, 2, 128>}]} {
    %c0_i32 = arith.constant 0 : i32
    %0 = arith.cmpi eq, %arg1, %c0_i32 : i32
    %1 = arith.extui %0 : i1 to i32
    %c0_i32_0 = arith.constant 0 : i32
    %2 = arith.cmpi ne, %1, %c0_i32_0 : i32
    scf.if %2 {
      %cst_51 = arith.constant 0.000000e+00 : f32
      %64 = vector.broadcast %cst_51 : f32 to vector<2x2x128xf32>
      %c0_52 = arith.constant 0 : index
      %c0_53 = arith.constant 0 : index
      %c0_54 = arith.constant 0 : index
      %65 = vector.load %arg5[%c0_52, %c0_53, %c0_54] : memref<2x2x128xf32, #tpu.memory_space<vmem>>, vector<2x2x128xf32>
      tpu.vector_store %arg5[%c0_52, %c0_53, %c0_54], %64 {strides = array<i32>} : memref<2x2x128xf32, #tpu.memory_space<vmem>>, vector<2x2x128xf32>,
      %cst_55 = arith.constant 0.000000e+00 : f32
      %66 = vector.broadcast %cst_55 : f32 to vector<2x2x128xf32>
      %c0_56 = arith.constant 0 : index
      %c0_57 = arith.constant 0 : index
      %c0_58 = arith.constant 0 : index
      %67 = vector.load %arg6[%c0_56, %c0_57, %c0_58] : memref<2x2x128xf32, #tpu.memory_space<vmem>>, vector<2x2x128xf32>
      tpu.vector_store %arg6[%c0_56, %c0_57, %c0_58], %66 {strides = array<i32>} : memref<2x2x128xf32, #tpu.memory_space<vmem>>, vector<2x2x128xf32>,
    } else {
    }
    %c0 = arith.constant 0 : index
    %c0_1 = arith.constant 0 : index
    %c0_2 = arith.constant 0 : index
    %c0_3 = arith.constant 0 : index
    %3 = vector.load %arg2[%c0, %c0_1, %c0_2, %c0_3] : memref<2x3x2x128xf32, #tpu.memory_space<vmem>>, vector<2x1x2x128xf32>
    %4 = vector.shape_cast %3 : vector<2x1x2x128xf32> to vector<2x2x128xf32>
    %c0_i32_4 = arith.constant 0 : i32
    %5 = vector.broadcast %c0_i32_4 : i32 to vector<2x2x128xi32>
    %c0_5 = arith.constant 0 : index
    %c1 = arith.constant 1 : index
    %c0_6 = arith.constant 0 : index
    %c0_7 = arith.constant 0 : index
    %6 = vector.load %arg2[%c0_5, %c1, %c0_6, %c0_7] : memref<2x3x2x128xf32, #tpu.memory_space<vmem>>, vector<2x1x2x128xf32>
    %7 = vector.shape_cast %6 : vector<2x1x2x128xf32> to vector<2x2x128xf32>
    %8 = arith.cmpf ogt, %7, %4 : vector<2x2x128xf32>
    %9 = arith.select %8, %7, %4 : vector<2x2x128xi1>, vector<2x2x128xf32>
    %c1_i32 = arith.constant 1 : i32
    %10 = vector.broadcast %c1_i32 : i32 to vector<2x2x128xi32>
    %11 = arith.select %8, %10, %5 : vector<2x2x128xi1>, vector<2x2x128xi32>
    %c0_8 = arith.constant 0 : index
    %c2 = arith.constant 2 : index
    %c0_9 = arith.constant 0 : index
    %c0_10 = arith.constant 0 : index
    %12 = vector.load %arg2[%c0_8, %c2, %c0_9, %c0_10] : memref<2x3x2x128xf32, #tpu.memory_space<vmem>>, vector<2x1x2x128xf32>
    %13 = vector.shape_cast %12 : vector<2x1x2x128xf32> to vector<2x2x128xf32>
    %14 = arith.cmpf ogt, %13, %9 : vector<2x2x128xf32>
    %c2_i32 = arith.constant 2 : i32
    %15 = vector.broadcast %c2_i32 : i32 to vector<2x2x128xi32>
    %16 = arith.select %14, %15, %11 : vector<2x2x128xi1>, vector<2x2x128xi32>
    %c1_i32_11 = arith.constant 1 : i32
    %17 = vector.broadcast %c1_i32_11 : i32 to vector<2x2x128xi32>
    %18 = arith.cmpi eq, %16, %17 : vector<2x2x128xi32>
    %19 = arith.extui %18 : vector<2x2x128xi1> to vector<2x2x128xi32>
    %20 = arith.sitofp %19 : vector<2x2x128xi32> to vector<2x2x128xf32>
    %c0_12 = arith.constant 0 : index
    %c1_13 = arith.constant 1 : index
    %c0_14 = arith.constant 0 : index
    %c0_15 = arith.constant 0 : index
    %21 = vector.load %arg3[%c0_12, %c1_13, %c0_14, %c0_15] : memref<2x3x2x128xf32, #tpu.memory_space<vmem>>, vector<2x1x2x128xf32>
    %22 = vector.shape_cast %21 : vector<2x1x2x128xf32> to vector<2x2x128xf32>
    %c0_16 = arith.constant 0 : index
    %c0_17 = arith.constant 0 : index
    %c0_18 = arith.constant 0 : index
    %23 = vector.load %arg5[%c0_16, %c0_17, %c0_18] : memref<2x2x128xf32, #tpu.memory_space<vmem>>, vector<1x2x128xf32>
    %24 = vector.shape_cast %23 : vector<1x2x128xf32> to vector<2x128xf32>
    %25 = arith.mulf %22, %20 : vector<2x2x128xf32>
    %cst = arith.constant dense<0.000000e+00> : vector<2x128xf32>
    %26 = vector.multi_reduction <add>, %25, %cst [0] : vector<2x2x128xf32> to vector<2x128xf32>
    %27 = arith.addf %24, %26 : vector<2x128xf32>
    %c0_19 = arith.constant 0 : index
    %c0_20 = arith.constant 0 : index
    %c0_21 = arith.constant 0 : index
    %28 = vector.load %arg5[%c0_19, %c0_20, %c0_21] : memref<2x2x128xf32, #tpu.memory_space<vmem>>, vector<1x2x128xf32>
    %29 = vector.shape_cast %28 : vector<1x2x128xf32> to vector<2x128xf32>
    %30 = vector.shape_cast %27 : vector<2x128xf32> to vector<1x2x128xf32>
    tpu.vector_store %arg5[%c0_19, %c0_20, %c0_21], %30 {strides = array<i32>} : memref<2x2x128xf32, #tpu.memory_space<vmem>>, vector<1x2x128xf32>,
    %c0_22 = arith.constant 0 : index
    %c0_23 = arith.constant 0 : index
    %c0_24 = arith.constant 0 : index
    %31 = vector.load %arg6[%c0_22, %c0_23, %c0_24] : memref<2x2x128xf32, #tpu.memory_space<vmem>>, vector<1x2x128xf32>
    %32 = vector.shape_cast %31 : vector<1x2x128xf32> to vector<2x128xf32>
    %cst_25 = arith.constant 1.000000e+00 : f32
    %33 = vector.broadcast %cst_25 : f32 to vector<2x2x128xf32>
    %34 = arith.mulf %33, %22 : vector<2x2x128xf32>
    %35 = arith.addf %34, %20 : vector<2x2x128xf32>
    %cst_26 = arith.constant dense<0.000000e+00> : vector<2x128xf32>
    %36 = vector.multi_reduction <add>, %35, %cst_26 [0] : vector<2x2x128xf32> to vector<2x128xf32>
    %37 = arith.addf %32, %36 : vector<2x128xf32>
    %c0_27 = arith.constant 0 : index
    %c0_28 = arith.constant 0 : index
    %c0_29 = arith.constant 0 : index
    %38 = vector.load %arg6[%c0_27, %c0_28, %c0_29] : memref<2x2x128xf32, #tpu.memory_space<vmem>>, vector<1x2x128xf32>
    %39 = vector.shape_cast %38 : vector<1x2x128xf32> to vector<2x128xf32>
    %40 = vector.shape_cast %37 : vector<2x128xf32> to vector<1x2x128xf32>
    tpu.vector_store %arg6[%c0_27, %c0_28, %c0_29], %40 {strides = array<i32>} : memref<2x2x128xf32, #tpu.memory_space<vmem>>, vector<1x2x128xf32>,
    %c0_30 = arith.constant 0 : index
    %c2_31 = arith.constant 2 : index
    %c0_32 = arith.constant 0 : index
    %c0_33 = arith.constant 0 : index
    %41 = vector.load %arg3[%c0_30, %c2_31, %c0_32, %c0_33] : memref<2x3x2x128xf32, #tpu.memory_space<vmem>>, vector<2x1x2x128xf32>
    %42 = vector.shape_cast %41 : vector<2x1x2x128xf32> to vector<2x2x128xf32>
    %c1_34 = arith.constant 1 : index
    %c0_35 = arith.constant 0 : index
    %c0_36 = arith.constant 0 : index
    %43 = vector.load %arg5[%c1_34, %c0_35, %c0_36] : memref<2x2x128xf32, #tpu.memory_space<vmem>>, vector<1x2x128xf32>
    %44 = vector.shape_cast %43 : vector<1x2x128xf32> to vector<2x128xf32>
    %45 = arith.mulf %42, %20 : vector<2x2x128xf32>
    %cst_37 = arith.constant dense<0.000000e+00> : vector<2x128xf32>
    %46 = vector.multi_reduction <add>, %45, %cst_37 [0] : vector<2x2x128xf32> to vector<2x128xf32>
    %47 = arith.addf %44, %46 : vector<2x128xf32>
    %c1_38 = arith.constant 1 : index
    %c0_39 = arith.constant 0 : index
    %c0_40 = arith.constant 0 : index
    %48 = vector.load %arg5[%c1_38, %c0_39, %c0_40] : memref<2x2x128xf32, #tpu.memory_space<vmem>>, vector<1x2x128xf32>
    %49 = vector.shape_cast %48 : vector<1x2x128xf32> to vector<2x128xf32>
    %50 = vector.shape_cast %47 : vector<2x128xf32> to vector<1x2x128xf32>
    tpu.vector_store %arg5[%c1_38, %c0_39, %c0_40], %50 {strides = array<i32>} : memref<2x2x128xf32, #tpu.memory_space<vmem>>, vector<1x2x128xf32>,
    %c1_41 = arith.constant 1 : index
    %c0_42 = arith.constant 0 : index
    %c0_43 = arith.constant 0 : index
    %51 = vector.load %arg6[%c1_41, %c0_42, %c0_43] : memref<2x2x128xf32, #tpu.memory_space<vmem>>, vector<1x2x128xf32>
    %52 = vector.shape_cast %51 : vector<1x2x128xf32> to vector<2x128xf32>
    %cst_44 = arith.constant 1.000000e+00 : f32
    %53 = vector.broadcast %cst_44 : f32 to vector<2x2x128xf32>
    %54 = arith.mulf %53, %42 : vector<2x2x128xf32>
    %55 = arith.addf %54, %20 : vector<2x2x128xf32>
    %cst_45 = arith.constant dense<0.000000e+00> : vector<2x128xf32>
    %56 = vector.multi_reduction <add>, %55, %cst_45 [0] : vector<2x2x128xf32> to vector<2x128xf32>
    %57 = arith.addf %52, %56 : vector<2x128xf32>
    %c1_46 = arith.constant 1 : index
    %c0_47 = arith.constant 0 : index
    %c0_48 = arith.constant 0 : index
    %58 = vector.load %arg6[%c1_46, %c0_47, %c0_48] : memref<2x2x128xf32, #tpu.memory_space<vmem>>, vector<1x2x128xf32>
    %59 = vector.shape_cast %58 : vector<1x2x128xf32> to vector<2x128xf32>
    %60 = vector.shape_cast %57 : vector<2x128xf32> to vector<1x2x128xf32>
    tpu.vector_store %arg6[%c1_46, %c0_47, %c0_48], %60 {strides = array<i32>} : memref<2x2x128xf32, #tpu.memory_space<vmem>>, vector<1x2x128xf32>,
    %c0_i32_49 = arith.constant 0 : i32
    %61 = arith.cmpi eq, %arg1, %c0_i32_49 : i32
    %62 = arith.extui %61 : i1 to i32
    %c0_i32_50 = arith.constant 0 : i32
    %63 = arith.cmpi ne, %62, %c0_i32_50 : i32
    scf.if %63 {
      %c0_51 = arith.constant 0 : index
      %c0_52 = arith.constant 0 : index
      %c0_53 = arith.constant 0 : index
      %64 = vector.load %arg5[%c0_51, %c0_52, %c0_53] : memref<2x2x128xf32, #tpu.memory_space<vmem>>, vector<2x2x128xf32>
      %cst_54 = arith.constant 2.000000e+00 : f32
      %65 = vector.broadcast %cst_54 : f32 to vector<2x2x128xf32>
      %66 = arith.mulf %65, %64 : vector<2x2x128xf32>
      %cst_55 = arith.constant 1.000000e-07 : f32
      %67 = vector.broadcast %cst_55 : f32 to vector<2x2x128xf32>
      %68 = arith.addf %66, %67 : vector<2x2x128xf32>
      %c0_56 = arith.constant 0 : index
      %c0_57 = arith.constant 0 : index
      %c0_58 = arith.constant 0 : index
      %69 = vector.load %arg6[%c0_56, %c0_57, %c0_58] : memref<2x2x128xf32, #tpu.memory_space<vmem>>, vector<2x2x128xf32>
      %cst_59 = arith.constant 1.000000e-07 : f32
      %70 = vector.broadcast %cst_59 : f32 to vector<2x2x128xf32>
      %71 = arith.addf %69, %70 : vector<2x2x128xf32>
      %72 = arith.divf %68, %71 : vector<2x2x128xf32>
      %c0_60 = arith.constant 0 : index
      %c0_61 = arith.constant 0 : index
      %c0_62 = arith.constant 0 : index
      %73 = vector.load %arg4[%c0_60, %c0_61, %c0_62] : memref<2x2x128xf32, #tpu.memory_space<vmem>>, vector<2x2x128xf32>
      tpu.vector_store %arg4[%c0_60, %c0_61, %c0_62], %72 {strides = array<i32>} : memref<2x2x128xf32, #tpu.memory_space<vmem>>, vector<2x2x128xf32>,
    } else {
    }
    return
  }
  func.func @transform_0(%arg0: i32, %arg1: i32) -> (i32, i32, i32, i32) {
    %c0_i32 = arith.constant 0 : i32
    %c0_i32_0 = arith.constant 0 : i32
    %c0_i32_1 = arith.constant 0 : i32
    return %arg1, %c0_i32, %arg0, %c0_i32_0 : i32, i32, i32, i32
  }
  func.func @transform_1(%arg0: i32, %arg1: i32) -> (i32, i32, i32, i32) {
    %c0_i32 = arith.constant 0 : i32
    %c0_i32_0 = arith.constant 0 : i32
    %c0_i32_1 = arith.constant 0 : i32
    return %arg1, %c0_i32, %arg0, %c0_i32_0 : i32, i32, i32, i32
  }
  func.func @transform_2(%arg0: i32, %arg1: i32) -> (i32, i32, i32) {
    %c0_i32 = arith.constant 0 : i32
    %c0_i32_0 = arith.constant 0 : i32
    %c0_i32_1 = arith.constant 0 : i32
    return %c0_i32, %arg0, %c0_i32_0 : i32, i32, i32
  }
}

</mosaic_0001>

<llo_original>
// kernel: tpu_custom_call.1
$region0: #{tpu_custom_call.1}
  #allocation0 [shape = 'u32[]', space=smem, size = 0x4, offset = 0x4, fixed_abs, tag = 'smem constant byte address 0x4 - core index']
  #allocation1 [shape = 'u32[144,128]{1,0:T(1,128)}', space=vmem, size = 0x12000, scoped, tag = 'internal scratch']
  #allocation2 [shape = 'f32[2,2,128]{2,1,0:T(2,128)}', space=vmem, size = 0x800, scoped, tag = 'scratch operand']
  #allocation3 [shape = 'f32[2,2,128]{2,1,0:T(2,128)}', space=vmem, size = 0x800, scoped, tag = 'scratch operand']
  %s0 = inlined_call_operand.hbm [shape: f32[2,3,2,128], index: 0, kind: input, shape index: {}]
  %s1 = inlined_call_operand.hbm [shape: f32[2,3,2,128], index: 1, kind: input, shape index: {}]
  %s2 = inlined_call_operand.hbm [shape: f32[2,2,128], index: 2, kind: output, shape index: {}]
  %s3 = sld [smem:[#allocation0]]
  $region34: #{tpu_custom_call.1} parent=0
    _
  %s5 = ssub.s32 1, %s3
  %s6 = scalar_select 0, %s5, %s3
  $region1: #{tpu_custom_call.1} parent=0
    #allocation4 [shape = 'u8[6144]{0}', space=vmem, size = 0x1800, scoped, tag = 'input window, operand 0, single buffered']
    #allocation5 [shape = 's32[1]{0}', space=sflag, size = 0x4, scoped, tag = 'scoped memory for tpu_custom_call.1']
    #allocation6 [shape = 's32[1]{0}', space=sflag, size = 0x4, scoped, tag = 'scoped memory for tpu_custom_call.1']
    #allocation7 [shape = 'u8[6144]{0}', space=vmem, size = 0x1800, scoped, tag = 'input window, operand 1, single buffered']
    #allocation8 [shape = 's32[1]{0}', space=sflag, size = 0x4, scoped, tag = 'scoped memory for tpu_custom_call.1']
    #allocation9 [shape = 'u8[2048]{0}', space=vmem, size = 0x800, scoped, tag = 'output window, operand 0, single buffered']
    %7 = vsyncpa [#allocation5], 0
    %8 = vsyncpa [#allocation8], 0
    %9 = vsyncpa [#allocation6], 0
    // Predicated region
    $region2: #{tpu_custom_call.1} parent=1 // pred_check
      _
    $region3: #{tpu_custom_call.1} parent=1 // pred_check_branch
      %11 = sbr.rel (0) target = $region5
    $region4: #{tpu_custom_call.1} parent=1 // pred_region
      %s13 = ssub.s32 192, 192
      %14 = vsyncadd [#allocation5], %s13
      %s15 = sshll.u32 [#allocation4], 4
      %s16 = int_to_ptr.vmem [resolvable:$true] %s15
      %21 = dma.hbm_to_vmem [thread:$0]  %s0, 192, %s16, [#allocation5], 32, 32, 2
    $region5: #{tpu_custom_call.1} parent=1 // pred_fallthru
      _
    // Predicated region
    $region6: #{tpu_custom_call.1} parent=1 // pred_check
      _
    $region7: #{tpu_custom_call.1} parent=1 // pred_check_branch
      %23 = sbr.rel (0) target = $region9
    $region8: #{tpu_custom_call.1} parent=1 // pred_region
      %s25 = ssub.s32 192, 192
      %26 = vsyncadd [#allocation8], %s25
      %s27 = sshll.u32 [#allocation7], 4
      %s28 = int_to_ptr.vmem [resolvable:$true] %s27
      %33 = dma.hbm_to_vmem [thread:$0]  %s1, 192, %s28, [#allocation8], 32, 32, 2
    $region9: #{tpu_custom_call.1} parent=1 // pred_fallthru
      _
    // Predicated region
    $region10: #{tpu_custom_call.1} parent=1 // pred_check
      _
    $region11: #{tpu_custom_call.1} parent=1 // pred_check_branch
      %35 = sbr.rel (0) target = $region13
    $region12: #{tpu_custom_call.1} parent=1 // pred_region
      %36 = dma.done [#allocation5], 192
    $region13: #{tpu_custom_call.1} parent=1 // pred_fallthru
      _
    // Predicated region
    $region14: #{tpu_custom_call.1} parent=1 // pred_check
      _
    $region15: #{tpu_custom_call.1} parent=1 // pred_check_branch
      %38 = sbr.rel (0) target = $region17
    $region16: #{tpu_custom_call.1} parent=1 // pred_region
      %39 = dma.done [#allocation8], 192
    $region17: #{tpu_custom_call.1} parent=1 // pred_fallthru
      _
    %p40 = scmp.eq.s32.totalorder 0, 0
    // Predicated region
    $region18: #{tpu_custom_call.1} parent=1 // pred_check
      %p41 = pneg %p40
    $region19: #{tpu_custom_call.1} parent=1 // pred_check_branch
      %43 = sbr.rel (%p41) target = $region21
    $region20: #{tpu_custom_call.1} parent=1 // pred_region
      %44 = vst [vmem:[#allocation2] sm:$0x3] 0.0
      %45 = vst [vmem:[#allocation2 + $0x2] sm:$0x3] 0.0
      %46 = vst [vmem:[#allocation3] sm:$0x3] 0.0
      %47 = vst [vmem:[#allocation3 + $0x2] sm:$0x3] 0.0
    $region21: #{tpu_custom_call.1} parent=1 // pred_fallthru
      _
    %v48 = vld [vmem:[#allocation4] sm:$0x3]
    %v49 = vld [vmem:[#allocation4 + $0x6] sm:$0x3]
    %s50 = scalar_lea.vmem [#allocation4], 2
    %v51 = vld [vmem:[%s50] sm:$0x3]
    %v52 = vld [vmem:[%s50 + $0x6] sm:$0x3]
    %vm53 = vcmp.gt.f32.partialorder %v51, %v48
    %vm54 = vcmp.gt.f32.partialorder %v52, %v49
    %v55 = vsel %vm53, %v51, %v48
    %v56 = vsel %vm54, %v52, %v49
    %v57 = vsel %vm53, 1, 0
    %v58 = vsel %vm54, 1, 0
    %s59 = scalar_lea.vmem [#allocation4], 4
    %v60 = vld [vmem:[%s59] sm:$0x3]
    %v61 = vld [vmem:[%s59 + $0x6] sm:$0x3]
    %vm62 = vcmp.gt.f32.partialorder %v60, %v55
    %vm63 = vcmp.gt.f32.partialorder %v61, %v56
    %v64 = vsel %vm62, 2, %v57
    %v65 = vsel %vm63, 2, %v58
    %vm66 = vcmp.eq.s32.totalorder %v64, 1
    %vm67 = vcmp.eq.s32.totalorder %v65, 1
    %v68 = vsel %vm66, 1, 0
    %v69 = vsel %vm67, 1, 0
    %v70 = vcvt.s32.f32 %v68
    %v71 = vcvt.s32.f32 %v69
    %s72 = scalar_lea.vmem [#allocation7], 2
    %v73 = vld [vmem:[%s72] sm:$0x3]
    %v74 = vld [vmem:[%s72 + $0x6] sm:$0x3]
    %v75 = vld [vmem:[#allocation2] sm:$0x3]
    %v76 = vmul.f32 %v73, %v70
    %v77 = vmul.f32 %v74, %v71
    %vm78 = vcmask 1041408
    %v79 = vsel %vm78, %v76, 0.0
    %v80 = vsel %vm78, %v77, 0.0
    %v81 = vadd.f32 %v79, %v80
    %v82 = vadd.f32 %v75, %v81
    %83 = vst [vmem:[#allocation2] sm:$0x3] %v82
    %v84 = vld [vmem:[#allocation3] sm:$0x3]
    %v85 = vadd.f32 %v73, %v70
    %v86 = vadd.f32 %v74, %v71
    %v87 = vsel %vm78, %v85, 0.0
    %v88 = vsel %vm78, %v86, 0.0
    %v89 = vadd.f32 %v87, %v88
    %v90 = vadd.f32 %v84, %v89
    %91 = vst [vmem:[#allocation3] sm:$0x3] %v90
    %s92 = scalar_lea.vmem [#allocation7], 4
    %v93 = vld [vmem:[%s92] sm:$0x3]
    %v94 = vld [vmem:[%s92 + $0x6] sm:$0x3]
    %s95 = scalar_lea.vmem [#allocation2], 2
    %v96 = vld [vmem:[%s95] sm:$0x3]
    %v97 = vmul.f32 %v93, %v70
    %v98 = vmul.f32 %v94, %v71
    %v99 = vsel %vm78, %v97, 0.0
    %v100 = vsel %vm78, %v98, 0.0
    %v101 = vadd.f32 %v99, %v100
    %v102 = vadd.f32 %v96, %v101
    %103 = vst [vmem:[%s95] sm:$0x3] %v102
    %s104 = scalar_lea.vmem [#allocation3], 2
    %v105 = vld [vmem:[%s104] sm:$0x3]
    %v106 = vadd.f32 %v93, %v70
    %v107 = vadd.f32 %v94, %v71
    %v108 = vsel %vm78, %v106, 0.0
    %v109 = vsel %vm78, %v107, 0.0
    %v110 = vadd.f32 %v108, %v109
    %v111 = vadd.f32 %v105, %v110
    %112 = vst [vmem:[%s104] sm:$0x3] %v111
    // Predicated region
    $region22: #{tpu_custom_call.1} parent=1 // pred_check
      %p113 = pneg %p40
    $region23: #{tpu_custom_call.1} parent=1 // pred_check_branch
      %115 = sbr.rel (%p113) target = $region25
    $region24: #{tpu_custom_call.1} parent=1 // pred_region
      %v116 = vld [vmem:[#allocation2] sm:$0x3]
      %v117 = vld [vmem:[#allocation2 + $0x2] sm:$0x3]
      %v118 = vmul.f32 %v116, 2.0
      %v119 = vmul.f32 %v117, 2.0
      %v120 = vadd.f32 %v118, 1e-07
      %v121 = vadd.f32 %v119, 1e-07
      %v122 = vld [vmem:[#allocation3] sm:$0x3]
      %v123 = vld [vmem:[#allocation3 + $0x2] sm:$0x3]
      %v124 = vadd.f32 %v122, 1e-07
      %v125 = vadd.f32 %v123, 1e-07
      %v126 = vrcp.pop %v124
      %v127 = vmul.f32 %v120, %v126
      %v128 = vrcp.pop %v125
      %v129 = vmul.f32 %v121, %v128
      %130 = vst [vmem:[#allocation9] sm:$0x3] %v127
      %131 = vst [vmem:[#allocation9 + $0x2] sm:$0x3] %v129
    $region25: #{tpu_custom_call.1} parent=1 // pred_fallthru
      _
    // Predicated region
    $region26: #{tpu_custom_call.1} parent=1 // pred_check
      _
    $region27: #{tpu_custom_call.1} parent=1 // pred_check_branch
      %133 = sbr.rel (0) target = $region29
    $region28: #{tpu_custom_call.1} parent=1 // pred_region
      %s135 = ssub.s32 64, 64
      %136 = vsyncadd [#allocation6], %s135
      %s137 = sshll.u32 [#allocation9], 4
      %s138 = int_to_ptr.vmem [resolvable:$true] %s137
      %143 = dma.vmem_to_hbm [thread:$0]  %s138, 64, %s2, [#allocation6], 32, 32, 2
    $region29: #{tpu_custom_call.1} parent=1 // pred_fallthru
      _
    // Predicated region
    $region30: #{tpu_custom_call.1} parent=1 // pred_check
      _
    $region31: #{tpu_custom_call.1} parent=1 // pred_check_branch
      %145 = sbr.rel (0) target = $region33
    $region32: #{tpu_custom_call.1} parent=1 // pred_region
      %146 = dma.done [#allocation6], 64
    $region33: #{tpu_custom_call.1} parent=1 // pred_fallthru
      _
    %147 = vsyncpa [#allocation5], 1
    %148 = vsyncpa [#allocation8], 1
    %149 = vsyncpa [#allocation6], 1

</llo_original>
